<compile_context>
chip_gen: v7x
topology: tpu7x:2x2x1
jax: 0.10.0
libtpu: 0.0.40
codegen_flags: <defaults>
</compile_context>

<pallas_src>
import math

import jax
import jax.numpy as jnp
from jax.experimental import pallas as pl
from jax.experimental.pallas import tpu as pltpu


def _round_up(n, m):
    return ((n + m - 1) // m) * m


def _sinusoidal_kernel(x_ref, freq_ref, out_ref):
    # x_ref:    (TB, 1)            f32
    # freq_ref: (1, half_dim)      f32
    # out_ref:  (TB, 2, half_dim)  out dtype
    emb = x_ref[...] * freq_ref[...]                 # (TB, half_dim) VPU broadcast mul
    out_ref[:, 0, :] = jnp.sin(emb).astype(out_ref.dtype)   # lane-dense store
    out_ref[:, 1, :] = jnp.cos(emb).astype(out_ref.dtype)   # lane-dense store


def sinusoidal_pos_emb(x, dim, theta=10000, out_dtype=jnp.float32):
    """Pallas TPU implementation of SinusoidalPosEmb.forward.

    x: (B,) array of timesteps.
    returns: (B, dim) embedding, [sin | cos] along the last axis.
    """
    assert dim % 2 == 0, "dim must be even"
    assert dim >= 4, "dim must be >= 4 (half_dim - 1 == 0 divides by zero otherwise)"
    half_dim = dim // 2
    b = x.shape[0]

    # Frequency table (pure function of dim/theta, no learned params):
    # exp(arange(half_dim) * -log(theta) / (half_dim - 1)), matches torch.
    scale = math.log(theta) / (half_dim - 1)
    freqs = jnp.exp(
        jnp.arange(half_dim, dtype=jnp.float32) * -scale
    ).reshape(1, half_dim)

    # Batch tile: multiple of 8 (sublane) rows, capped at 512 so the
    # double-buffered per-step output block stays a few MiB at most
    # (512 * dim * 4B <= ~2 MiB for dim <= 1024), safe for v7x/v5e VMEM.
    tb = min(_round_up(max(b, 1), 8), 512)
    b_pad = _round_up(b, tb)

    x2d = x.astype(jnp.float32).reshape(b, 1)
    if b_pad != b:
        x2d = jnp.pad(x2d, ((0, b_pad - b), (0, 0)))

    grid = (b_pad // tb,)

    out3 = pl.pallas_call(
        _sinusoidal_kernel,
        out_shape=jax.ShapeDtypeStruct((b_pad, 2, half_dim), out_dtype),
        grid=grid,
        in_specs=[
            pl.BlockSpec((tb, 1), lambda i: (i, 0)),
            pl.BlockSpec((1, half_dim), lambda i: (0, 0)),
        ],
        out_specs=pl.BlockSpec((tb, 2, half_dim), lambda i: (i, 0, 0)),
        compiler_params=pltpu.CompilerParams(
            dimension_semantics=("parallel",),
        ),
    )(x2d, freqs)

    # Contiguous reshape (free): (B, 2, half_dim) -> (B, dim) == [sin | cos].
    out = out3.reshape(b_pad, dim)
    if b_pad != b:
        out = out[:b]
    return out


def _reference(x, dim, theta=10000):
    half_dim = dim // 2
    scale = math.log(theta) / (half_dim - 1)
    freqs = jnp.exp(jnp.arange(half_dim, dtype=jnp.float32) * -scale)
    emb = x.astype(jnp.float32)[:, None] * freqs[None, :]
    return jnp.concatenate([jnp.sin(emb), jnp.cos(emb)], axis=-1)


if __name__ == "__main__":
    key = jax.random.PRNGKey(0)

    # Small case matching typical diffusion time-embedding usage.
    batch = 8
    dim = 32  # half_dim = 16
    x = jax.random.uniform(key, (batch,), dtype=jnp.float32,
                           minval=0.0, maxval=1000.0)
    out = jax.block_until_ready(sinusoidal_pos_emb(x, dim))
    ref = _reference(x, dim)
    assert out.shape == (batch, dim), out.shape
    assert jnp.allclose(out, ref, atol=1e-5, rtol=1e-5), "mismatch vs reference (B=8)"

    # Second small case with B not a multiple of 8 to exercise the pad/slice path.
    batch2, dim2 = 20, 64
    x2 = jax.random.uniform(jax.random.PRNGKey(1), (batch2,), dtype=jnp.float32,
                            minval=0.0, maxval=1000.0)
    out2 = jax.block_until_ready(sinusoidal_pos_emb(x2, dim2))
    ref2 = _reference(x2, dim2)
    assert out2.shape == (batch2, dim2), out2.shape
    assert jnp.allclose(out2, ref2, atol=1e-5, rtol=1e-5), "mismatch vs reference (B=20)"

    print("KERNEL_OK")
</pallas_src>

<mosaic_0001>
module attributes {stable_mosaic.version = 11 : i64} {
  func.func @_sinusoidal_kernel(%arg0: i32, %arg1: memref<8x1xf32, #tpu.memory_space<vmem>>, %arg2: memref<1x16xf32, #tpu.memory_space<vmem>>, %arg3: memref<8x2x16xf32, #tpu.memory_space<vmem>>) attributes {dimension_semantics = [#tpu.dimension_semantics<parallel>], iteration_bounds = array<i64: 1>, scalar_prefetch = 0 : i64, scratch_operands = 0 : i64, tpu.core_type = #tpu.core_type<tc>, window_params = [{transform_indices = @transform_0, window_bounds = array<i64: 8, 1>}, {pipeline_mode = #tpu.pipeline_mode<synchronous>, transform_indices = @transform_1, window_bounds = array<i64: 1, 16>}, {transform_indices = @transform_2, window_bounds = array<i64: 8, 2, 16>}]} {
    %c0 = arith.constant 0 : index
    %c0_0 = arith.constant 0 : index
    %0 = vector.load %arg1[%c0, %c0_0] : memref<8x1xf32, #tpu.memory_space<vmem>>, vector<8x1xf32>
    %c0_1 = arith.constant 0 : index
    %c0_2 = arith.constant 0 : index
    %1 = vector.load %arg2[%c0_1, %c0_2] : memref<1x16xf32, #tpu.memory_space<vmem>>, vector<1x16xf32>
    %2 = vector.broadcast %0 : vector<8x1xf32> to vector<8x16xf32>
    %3 = vector.broadcast %1 : vector<1x16xf32> to vector<8x16xf32>
    %4 = arith.mulf %2, %3 : vector<8x16xf32>
    %5 = math.sin %4 : vector<8x16xf32>
    %c0_3 = arith.constant 0 : index
    %c0_4 = arith.constant 0 : index
    %c0_5 = arith.constant 0 : index
    %6 = vector.load %arg3[%c0_3, %c0_4, %c0_5] : memref<8x2x16xf32, #tpu.memory_space<vmem>>, vector<8x1x16xf32>
    %7 = vector.shape_cast %6 : vector<8x1x16xf32> to vector<8x16xf32>
    %8 = vector.shape_cast %5 : vector<8x16xf32> to vector<8x1x16xf32>
    tpu.vector_store %arg3[%c0_3, %c0_4, %c0_5], %8 {strides = array<i32>} : memref<8x2x16xf32, #tpu.memory_space<vmem>>, vector<8x1x16xf32>,
    %9 = math.cos %4 : vector<8x16xf32>
    %c0_6 = arith.constant 0 : index
    %c1 = arith.constant 1 : index
    %c0_7 = arith.constant 0 : index
    %10 = vector.load %arg3[%c0_6, %c1, %c0_7] : memref<8x2x16xf32, #tpu.memory_space<vmem>>, vector<8x1x16xf32>
    %11 = vector.shape_cast %10 : vector<8x1x16xf32> to vector<8x16xf32>
    %12 = vector.shape_cast %9 : vector<8x16xf32> to vector<8x1x16xf32>
    tpu.vector_store %arg3[%c0_6, %c1, %c0_7], %12 {strides = array<i32>} : memref<8x2x16xf32, #tpu.memory_space<vmem>>, vector<8x1x16xf32>,
    return
  }
  func.func @transform_0(%arg0: i32) -> (i32, i32) {
    %c0_i32 = arith.constant 0 : i32
    %c0_i32_0 = arith.constant 0 : i32
    return %arg0, %c0_i32 : i32, i32
  }
  func.func @transform_1(%arg0: i32) -> (i32, i32) {
    %c0_i32 = arith.constant 0 : i32
    %c0_i32_0 = arith.constant 0 : i32
    %c0_i32_1 = arith.constant 0 : i32
    return %c0_i32, %c0_i32_0 : i32, i32
  }
  func.func @transform_2(%arg0: i32) -> (i32, i32, i32) {
    %c0_i32 = arith.constant 0 : i32
    %c0_i32_0 = arith.constant 0 : i32
    %c0_i32_1 = arith.constant 0 : i32
    return %arg0, %c0_i32, %c0_i32_0 : i32, i32, i32
  }
}

</mosaic_0001>

<llo_original>
// kernel: tpu_custom_call.1
$region0: #{tpu_custom_call.1}
  #allocation0 [shape = 'u32[]', space=smem, size = 0x4, offset = 0x4, fixed_abs, tag = 'smem constant byte address 0x4 - core index']
  #allocation1 [shape = 'u32[144,128]{1,0:T(1,128)}', space=vmem, size = 0x12000, scoped, tag = 'internal scratch']
  %s0 = inlined_call_operand.vmem [shape: f32[8,1], index: 0, kind: input, shape index: {}]
  %s1 = inlined_call_operand.vmem [shape: f32[1,16], index: 1, kind: input, shape index: {}]
  %s2 = inlined_call_operand.hbm [shape: f32[8,2,16], index: 2, kind: output, shape index: {}]
  %s3 = sld [smem:[#allocation0]]
  $region18: #{tpu_custom_call.1} parent=0
    _
  %s5 = ssub.s32 1, %s3
  %s6 = scalar_select 0, %s5, %s3
  $region1: #{tpu_custom_call.1} parent=0
    #allocation2 [shape = 'u8[8192]{0}', space=vmem, size = 0x2000, scoped, tag = 'output window, operand 0, single buffered']
    #allocation3 [shape = 's32[1]{0}', space=sflag, size = 0x4, scoped, tag = 'scoped memory for tpu_custom_call.1']
    %7 = vsyncpa [#allocation3], 0
    // Predicated region
    $region2: #{tpu_custom_call.1} parent=1 // pred_check
      _
    $region3: #{tpu_custom_call.1} parent=1 // pred_check_branch
      %9 = sbr.rel (0) target = $region5
    $region4: #{tpu_custom_call.1} parent=1 // pred_region
      _
    $region5: #{tpu_custom_call.1} parent=1 // pred_fallthru
      _
    // Predicated region
    $region6: #{tpu_custom_call.1} parent=1 // pred_check
      _
    $region7: #{tpu_custom_call.1} parent=1 // pred_check_branch
      %11 = sbr.rel (0) target = $region9
    $region8: #{tpu_custom_call.1} parent=1 // pred_region
      _
    $region9: #{tpu_custom_call.1} parent=1 // pred_fallthru
      _
    %v12 = vld [vmem:[%s0] sm:$0xff]
    %v13 = vld [vmem:[%s1] sm:$0x1]
    %15 = vset.pattern.permute.xlu0 0
    %16 = vperm.xlu0 %15, %v12
    %v17 = vpop.permute.xlu0 %16
    %v20 = vlaneseq
    %v21 = vshrl.u32 %v20, 7
    %v22 = vsub.s32 0, %v21
    %v23 = vrot.slane %v13, %v22
    %v25 = vmul.f32 %v17, %v23
    %v26 = vand.u32 2147483647, %v25
    %vm27 = vcmp.le.f32.partialorder %v26, 0.7853982
    %vm28 = vcmp.lt.s32.totalorder %v25, 0
    %v29 = vand.u32 %v25, 2139095040
    %v30 = vshrl.u32 %v29, 23
    %v31 = vsub.s32 %v30, 127
    %v32 = vand.u32 2147483647, %v25
    %v33 = vand.u32 %v32, 8388607
    %v34 = vor.u32 %v33, 8388608
    %v35 = vsub.s32 0, %v34
    %v36 = vadd.s32 %v31, 1
    %vm37 = vcmp.gt.s32.totalorder %v36, 0
    %v38 = vsel %vm37, %v36, 0
    %v39 = vshrl.u32 %v38, 5
    %v40 = vand.u32 %v38, 31
    %v41 = vsub.s32 32, %v40
    %v42 = vshrl.u32 683565275, %v41
    %v43 = vshll.u32 683565275, %v40
    %v44 = vshrl.u32 2475754826, %v41
    %v45 = vor.u32 %v43, %v44
    %v46 = vshll.u32 2475754826, %v40
    %v47 = vshrl.u32 2131351028, %v41
    %v48 = vor.u32 %v46, %v47
    %v49 = vshll.u32 2131351028, %v40
    %v50 = vshrl.u32 2102212464, %v41
    %v51 = vor.u32 %v49, %v50
    %v52 = vshll.u32 2102212464, %v40
    %v53 = vshrl.u32 920167782, %v41
    %v54 = vor.u32 %v52, %v53
    %v55 = vshll.u32 920167782, %v40
    %v56 = vshrl.u32 1326507024, %v41
    %v57 = vor.u32 %v55, %v56
    %vm58 = vcmp.lt.s32.totalorder %v39, 1
    %vm59 = vcmp.lt.s32.totalorder %v39, 2
    %vm60 = vcmp.lt.s32.totalorder %v39, 3
    %vm61 = vcmp.lt.s32.totalorder %v39, 4
    %v62 = vsel %vm58, %v42, %v45
    %v63 = vsel %vm61, %v51, 2102212464
    %v64 = vsel %vm60, %v48, %v63
    %v65 = vsel %vm59, %v62, %v64
    %v66 = vsel %vm58, %v45, %v48
    %v67 = vsel %vm61, %v54, 920167782
    %v68 = vsel %vm60, %v51, %v67
    %v69 = vsel %vm59, %v66, %v68
    %v70 = vsel %vm58, %v48, %v51
    %v71 = vsel %vm61, %v57, 1326507024
    %v72 = vsel %vm60, %v54, %v71
    %v73 = vsel %vm59, %v70, %v72
    %v74 = vshll.u32 %v34, 8
    %v75 = vmul.u32.u64.compose %v74, %v73
    %v76 = vextract.low.u32 %v75
    %v77 = vextract.high.u32 %v75
    %v78 = vmul.u32.u64.compose %v74, %v69
    %v79 = vextract.low.u32 %v78
    %v80 = vextract.high.u32 %v78
    %v81 = vmul.u32 %v74, %v65
    %v82 = vadd.s32 %v77, %v79
    %vm83 = vc.u32 %v77, %v79
    %v84 = vadd.s32 %v80, 1
    %v85 = vsel %vm83, %v84, %v80
    %v86 = vadd.s32 %v81, %v85
    %v87 = vadd.s32 %v86, 536870912
    %v88 = vshrl.u32 %v87, 30
    %v89 = vshll.u32 %v88, 30
    %v90 = vsub.s32 %v86, %v89
    %vm91 = vcmp.lt.s32.totalorder %v90, 0
    %v92 = vsub.s32 0, %v90
    %v93 = vsel %vm91, %v92, %v90
    %v94 = vclz %v93
    %v95 = vsub.s32 %v94, 2
    %vm96 = vcmp.gt.s32.totalorder 0, %v95
    %v97 = vsel %vm96, 0, %v95
    %v98 = vsub.s32 32, %v97
    %v99 = vshll.u32 %v90, %v97
    %v100 = vshrl.u32 %v82, %v98
    %v101 = vor.u32 %v99, %v100
    %v102 = vsub.s32 4294967266, %v97
    %v103 = vadd.s32 %v102, 127
    %v104 = vshll.u32 %v103, 23
    %v105 = vor.u32 4788187, %v104
    %v106 = vand.u32 2147483647, %v105
    %v108 = vcvt.s32.f32 %v101
    %v109 = vmul.f32 %v108, %v106
    %v110 = vxor.u32 %v109, 2147483648
    %v111 = vsel %vm28, %v110, %v109
    %v112 = vsub.s32 4, %v88
    %v113 = vsel %vm28, %v112, %v88
    %v114 = vsel %vm27, %v25, %v111
    %v115 = vsel %vm27, 0, %v113
    %v116 = vcosq.f32.pop %v114
    %v117 = vsinq.f32.pop %v114
    %vm118 = vweird.f32 %v25
    %v119 = vadd.s32 %v115, 3
    %v120 = vand.u32 %v119, 3
    %vm121 = vcmp.lt.s32.totalorder %v120, 2
    %vm122 = vcmp.eq.s32.totalorder %v120, 0
    %v123 = vxor.u32 %v117, 2147483648
    %v124 = vsel %vm122, %v116, %v123
    %vm125 = vcmp.eq.s32.totalorder %v120, 2
    %v126 = vxor.u32 %v116, 2147483648
    %v127 = vsel %vm125, %v126, %v117
    %v128 = vsel %vm121, %v124, %v127
    %v129 = vsel %vm118, nan, %v128
    %v131 = vcombine.high %v129, %v129
    %v133 = vunpack.c.l.s4 1966171168
    %v134 = vunpack.c.0.s8 %v133
    %v135 = vlaneseq
    %v136 = vshrl.u32 %v135, 7
    %v137 = vsub.s32 %v134, %v136
    %v138 = vrot.slane %v129, %v137
    %v140 = vunpack.c.l.s4 1966171168
    %v141 = vunpack.c.0.s8 %v140
    %v142 = vlaneseq
    %v143 = vshrl.u32 %v142, 7
    %v144 = vsub.s32 %v141, %v143
    %v145 = vrot.slane %v131, %v144
    %v146 = vcombine.high %v138, %v138
    %v147 = vcombine.high %v145, %v145
    %v149 = vunpack.c.l.s4 1966171168
    %v150 = vunpack.c.0.s8 %v149
    %v151 = vlaneseq
    %v152 = vshrl.u32 %v151, 7
    %v153 = vsub.s32 %v150, %v152
    %v154 = vrot.slane %v138, %v153
    %v156 = vunpack.c.l.s4 1966171168
    %v157 = vunpack.c.0.s8 %v156
    %v158 = vlaneseq
    %v159 = vshrl.u32 %v158, 7
    %v160 = vsub.s32 %v157, %v159
    %v161 = vrot.slane %v145, %v160
    %v163 = vunpack.c.l.s4 1966171168
    %v164 = vunpack.c.0.s8 %v163
    %v165 = vlaneseq
    %v166 = vshrl.u32 %v165, 7
    %v167 = vsub.s32 %v164, %v166
    %v168 = vrot.slane %v146, %v167
    %v170 = vunpack.c.l.s4 1966171168
    %v171 = vunpack.c.0.s8 %v170
    %v172 = vlaneseq
    %v173 = vshrl.u32 %v172, 7
    %v174 = vsub.s32 %v171, %v173
    %v175 = vrot.slane %v147, %v174
    %v176 = vcombine.high %v154, %v154
    %v177 = vcombine.high %v161, %v161
    %v178 = vcombine.high %v168, %v168
    %v179 = vcombine.high %v175, %v175
    %vm188 = vcmask 122880
    %189 = vst.msk [vmem:[#allocation2] sm:$0x1] %vm188, %v154
    %190 = vst.msk [vmem:[#allocation2 + $0x2] sm:$0x1] %vm188, %v168
    %191 = vst.msk [vmem:[#allocation2 + $0x4] sm:$0x1] %vm188, %v176
    %192 = vst.msk [vmem:[#allocation2 + $0x6] sm:$0x1] %vm188, %v178
    %193 = vst.msk [vmem:[#allocation2 + $0x8] sm:$0x1] %vm188, %v161
    %194 = vst.msk [vmem:[#allocation2 + $0xa] sm:$0x1] %vm188, %v175
    %195 = vst.msk [vmem:[#allocation2 + $0xc] sm:$0x1] %vm188, %v177
    %196 = vst.msk [vmem:[#allocation2 + $0xe] sm:$0x1] %vm188, %v179
    %v197 = vand.u32 2147483647, %v25
    %vm198 = vcmp.le.f32.partialorder %v197, 0.7853982
    %vm199 = vcmp.lt.s32.totalorder %v25, 0
    %v200 = vand.u32 %v25, 2139095040
    %v201 = vshrl.u32 %v200, 23
    %v202 = vsub.s32 %v201, 127
    %v203 = vand.u32 2147483647, %v25
    %v204 = vand.u32 %v203, 8388607
    %v205 = vor.u32 %v204, 8388608
    %v206 = vsub.s32 0, %v205
    %v207 = vadd.s32 %v202, 1
    %vm208 = vcmp.gt.s32.totalorder %v207, 0
    %v209 = vsel %vm208, %v207, 0
    %v210 = vshrl.u32 %v209, 5
    %v211 = vand.u32 %v209, 31
    %v212 = vsub.s32 32, %v211
    %v213 = vshrl.u32 683565275, %v212
    %v214 = vshll.u32 683565275, %v211
    %v215 = vshrl.u32 2475754826, %v212
    %v216 = vor.u32 %v214, %v215
    %v217 = vshll.u32 2475754826, %v211
    %v218 = vshrl.u32 2131351028, %v212
    %v219 = vor.u32 %v217, %v218
    %v220 = vshll.u32 2131351028, %v211
    %v221 = vshrl.u32 2102212464, %v212
    %v222 = vor.u32 %v220, %v221
    %v223 = vshll.u32 2102212464, %v211
    %v224 = vshrl.u32 920167782, %v212
    %v225 = vor.u32 %v223, %v224
    %v226 = vshll.u32 920167782, %v211
    %v227 = vshrl.u32 1326507024, %v212
    %v228 = vor.u32 %v226, %v227
    %vm229 = vcmp.lt.s32.totalorder %v210, 1
    %vm230 = vcmp.lt.s32.totalorder %v210, 2
    %vm231 = vcmp.lt.s32.totalorder %v210, 3
    %vm232 = vcmp.lt.s32.totalorder %v210, 4
    %v233 = vsel %vm229, %v213, %v216
    %v234 = vsel %vm232, %v222, 2102212464
    %v235 = vsel %vm231, %v219, %v234
    %v236 = vsel %vm230, %v233, %v235
    %v237 = vsel %vm229, %v216, %v219
    %v238 = vsel %vm232, %v225, 920167782
    %v239 = vsel %vm231, %v222, %v238
    %v240 = vsel %vm230, %v237, %v239
    %v241 = vsel %vm229, %v219, %v222
    %v242 = vsel %vm232, %v228, 1326507024
    %v243 = vsel %vm231, %v225, %v242
    %v244 = vsel %vm230, %v241, %v243
    %v245 = vshll.u32 %v205, 8
    %v246 = vmul.u32.u64.compose %v245, %v244
    %v247 = vextract.low.u32 %v246
    %v248 = vextract.high.u32 %v246
    %v249 = vmul.u32.u64.compose %v245, %v240
    %v250 = vextract.low.u32 %v249
    %v251 = vextract.high.u32 %v249
    %v252 = vmul.u32 %v245, %v236
    %v253 = vadd.s32 %v248, %v250
    %vm254 = vc.u32 %v248, %v250
    %v255 = vadd.s32 %v251, 1
    %v256 = vsel %vm254, %v255, %v251
    %v257 = vadd.s32 %v252, %v256
    %v258 = vadd.s32 %v257, 536870912
    %v259 = vshrl.u32 %v258, 30
    %v260 = vshll.u32 %v259, 30
    %v261 = vsub.s32 %v257, %v260
    %vm262 = vcmp.lt.s32.totalorder %v261, 0
    %v263 = vsub.s32 0, %v261
    %v264 = vsel %vm262, %v263, %v261
    %v265 = vclz %v264
    %v266 = vsub.s32 %v265, 2
    %vm267 = vcmp.gt.s32.totalorder 0, %v266
    %v268 = vsel %vm267, 0, %v266
    %v269 = vsub.s32 32, %v268
    %v270 = vshll.u32 %v261, %v268
    %v271 = vshrl.u32 %v253, %v269
    %v272 = vor.u32 %v270, %v271
    %v273 = vsub.s32 4294967266, %v268
    %v274 = vadd.s32 %v273, 127
    %v275 = vshll.u32 %v274, 23
    %v276 = vor.u32 4788187, %v275
    %v277 = vand.u32 2147483647, %v276
    %v279 = vcvt.s32.f32 %v272
    %v280 = vmul.f32 %v279, %v277
    %v281 = vxor.u32 %v280, 2147483648
    %v282 = vsel %vm199, %v281, %v280
    %v283 = vsub.s32 4, %v259
    %v284 = vsel %vm199, %v283, %v259
    %v285 = vsel %vm198, %v25, %v282
    %v286 = vsel %vm198, 0, %v284
    %v287 = vcosq.f32.pop %v285
    %v288 = vsinq.f32.pop %v285
    %vm289 = vweird.f32 %v25
    %v290 = vand.u32 %v286, 3
    %vm291 = vcmp.lt.s32.totalorder %v290, 2
    %vm292 = vcmp.eq.s32.totalorder %v290, 0
    %v293 = vxor.u32 %v288, 2147483648
    %v294 = vsel %vm292, %v287, %v293
    %vm295 = vcmp.eq.s32.totalorder %v290, 2
    %v296 = vxor.u32 %v287, 2147483648
    %v297 = vsel %vm295, %v296, %v288
    %v298 = vsel %vm291, %v294, %v297
    %v299 = vsel %vm289, nan, %v298
    %v301 = vcombine.high %v299, %v299
    %v303 = vunpack.c.l.s4 1966171168
    %v304 = vunpack.c.0.s8 %v303
    %v305 = vlaneseq
    %v306 = vshrl.u32 %v305, 7
    %v307 = vsub.s32 %v304, %v306
    %v308 = vrot.slane %v299, %v307
    %v310 = vunpack.c.l.s4 1966171168
    %v311 = vunpack.c.0.s8 %v310
    %v312 = vlaneseq
    %v313 = vshrl.u32 %v312, 7
    %v314 = vsub.s32 %v311, %v313
    %v315 = vrot.slane %v301, %v314
    %v316 = vcombine.high %v308, %v308
    %v317 = vcombine.high %v315, %v315
    %v319 = vunpack.c.l.s4 1966171168
    %v320 = vunpack.c.0.s8 %v319
    %v321 = vlaneseq
    %v322 = vshrl.u32 %v321, 7
    %v323 = vsub.s32 %v320, %v322
    %v324 = vrot.slane %v308, %v323
    %v326 = vunpack.c.l.s4 1966171168
    %v327 = vunpack.c.0.s8 %v326
    %v328 = vlaneseq
    %v329 = vshrl.u32 %v328, 7
    %v330 = vsub.s32 %v327, %v329
    %v331 = vrot.slane %v315, %v330
    %v333 = vunpack.c.l.s4 1966171168
    %v334 = vunpack.c.0.s8 %v333
    %v335 = vlaneseq
    %v336 = vshrl.u32 %v335, 7
    %v337 = vsub.s32 %v334, %v336
    %v338 = vrot.slane %v316, %v337
    %v340 = vunpack.c.l.s4 1966171168
    %v341 = vunpack.c.0.s8 %v340
    %v342 = vlaneseq
    %v343 = vshrl.u32 %v342, 7
    %v344 = vsub.s32 %v341, %v343
    %v345 = vrot.slane %v317, %v344
    %v346 = vcombine.high %v324, %v324
    %v347 = vcombine.high %v331, %v331
    %v348 = vcombine.high %v338, %v338
    %v349 = vcombine.high %v345, %v345
    %358 = vst.msk [vmem:[#allocation2 + $0x1] sm:$0x1] %vm188, %v324
    %359 = vst.msk [vmem:[#allocation2 + $0x3] sm:$0x1] %vm188, %v338
    %360 = vst.msk [vmem:[#allocation2 + $0x5] sm:$0x1] %vm188, %v346
    %361 = vst.msk [vmem:[#allocation2 + $0x7] sm:$0x1] %vm188, %v348
    %362 = vst.msk [vmem:[#allocation2 + $0x9] sm:$0x1] %vm188, %v331
    %363 = vst.msk [vmem:[#allocation2 + $0xb] sm:$0x1] %vm188, %v345
    %364 = vst.msk [vmem:[#allocation2 + $0xd] sm:$0x1] %vm188, %v347
    %365 = vst.msk [vmem:[#allocation2 + $0xf] sm:$0x1] %vm188, %v349
    // Predicated region
    $region10: #{tpu_custom_call.1} parent=1 // pred_check
      _
    $region11: #{tpu_custom_call.1} parent=1 // pred_check_branch
      %367 = sbr.rel (0) target = $region13
    $region12: #{tpu_custom_call.1} parent=1 // pred_region
      %s369 = ssub.s32 256, 256
      %370 = vsyncadd [#allocation3], %s369
      %s371 = sshll.u32 [#allocation2], 4
      %s372 = int_to_ptr.vmem [resolvable:$true] %s371
      %377 = dma.vmem_to_hbm [thread:$0]  %s372, 256, %s2, [#allocation3], 32, 32, 2
    $region13: #{tpu_custom_call.1} parent=1 // pred_fallthru
      _
    // Predicated region
    $region14: #{tpu_custom_call.1} parent=1 // pred_check
      _
    $region15: #{tpu_custom_call.1} parent=1 // pred_check_branch
      %379 = sbr.rel (0) target = $region17
    $region16: #{tpu_custom_call.1} parent=1 // pred_region
      %380 = dma.done [#allocation3], 256
    $region17: #{tpu_custom_call.1} parent=1 // pred_fallthru
      _
    %381 = vsyncpa [#allocation3], 1

</llo_original>
